<compile_context>
chip_gen: v6e
topology: v6e:2x2x1
jax: 0.10.0
libtpu: 0.0.40
codegen_flags: <defaults>
</compile_context>

<pallas_src>
import jax
import jax.numpy as jnp
from jax.experimental import pallas as pl
from jax.experimental.pallas import tpu as pltpu


def _round_up(n, m):
    return ((n + m - 1) // m) * m


# ---------------------------------------------------------------------------
# Kernel: one batch tile through the whole 4-layer MLP, weights resident.
# ---------------------------------------------------------------------------
def dqn_kernel(x_ref, w1_ref, b1_ref, w2_ref, b2_ref, w3_ref, b3_ref,
               w4_ref, b4_ref, out_ref):
    # Layer 1: Linear(inp, 128) + ReLU
    h = jnp.dot(x_ref[...], w1_ref[...], preferred_element_type=jnp.float32)
    h = jnp.maximum(h + b1_ref[...], 0.0)
    # Layer 2: Linear(128, 64) + ReLU
    h = jnp.dot(h, w2_ref[...], preferred_element_type=jnp.float32)
    h = jnp.maximum(h + b2_ref[...], 0.0)
    # Layer 3: Linear(64, 32) + ReLU
    h = jnp.dot(h, w3_ref[...], preferred_element_type=jnp.float32)
    h = jnp.maximum(h + b3_ref[...], 0.0)
    # Layer 4: Linear(32, out), no activation
    h = jnp.dot(h, w4_ref[...], preferred_element_type=jnp.float32)
    out_ref[...] = (h + b4_ref[...]).astype(out_ref.dtype)


# ---------------------------------------------------------------------------
# Parameter handling
# ---------------------------------------------------------------------------
def init_params(key, inp_size, out_size):
    """PyTorch-style uniform fan-in init; W stored as [in, out] (x @ W + b)."""
    dims = [(inp_size, 128), (128, 64), (64, 32), (32, out_size)]
    params = {}
    keys = jax.random.split(key, 2 * len(dims))
    for i, (fan_in, fan_out) in enumerate(dims):
        bound = 1.0 / (fan_in ** 0.5)
        params[f"w{i + 1}"] = jax.random.uniform(
            keys[2 * i], (fan_in, fan_out), jnp.float32, -bound, bound)
        params[f"b{i + 1}"] = jax.random.uniform(
            keys[2 * i + 1], (fan_out,), jnp.float32, -bound, bound)
    return params


def pack_params(params):
    """Keep true shapes; biases as [1, out] rows for in-kernel broadcast."""
    packed = []
    for i in range(1, 5):
        packed.append(params[f"w{i}"])
        packed.append(params[f"b{i}"].reshape(1, -1))
    return tuple(packed)


# ---------------------------------------------------------------------------
# Wrapper
# ---------------------------------------------------------------------------
def dqn_forward(x, packed, *, batch_tile=4096):
    """x: [B, inp_size] f32; packed: (w1,b1,w2,b2,w3,b3,w4,b4) at true shapes."""
    w1, b1, w2, b2, w3, b3, w4, b4 = packed
    B, inp_size = x.shape
    assert w1.shape[0] == inp_size
    out_size = w4.shape[1]

    # Batch tile: multiple of 8 sublanes, large to amortize the per-step cost.
    tb = min(batch_tile, _round_up(B, 8))
    num_tiles = pl.cdiv(B, tb)
    # v7x megacore: prefer an even number of grid steps so the "parallel" batch
    # axis splits evenly across both TensorCores (harmless on v5e/v6e).
    if num_tiles > 1 and num_tiles % 2 == 1:
        tb = _round_up(pl.cdiv(B, num_tiles + 1), 8)
        num_tiles = pl.cdiv(B, tb)

    const2 = lambda i: (0, 0)  # weights/biases: DMA once, stay VMEM-resident

    out = pl.pallas_call(
        dqn_kernel,
        out_shape=jax.ShapeDtypeStruct((B, out_size), jnp.float32),
        grid=(num_tiles,),
        in_specs=[
            # Streamed batch tile of activations at natural feature width.
            pl.BlockSpec((tb, inp_size), lambda i: (i, 0)),
            pl.BlockSpec(w1.shape, const2),
            pl.BlockSpec(b1.shape, const2),
            pl.BlockSpec(w2.shape, const2),
            pl.BlockSpec(b2.shape, const2),
            pl.BlockSpec(w3.shape, const2),
            pl.BlockSpec(b3.shape, const2),
            pl.BlockSpec(w4.shape, const2),
            pl.BlockSpec(b4.shape, const2),
        ],
        # Output at true width; ragged last block is masked by Pallas.
        out_specs=pl.BlockSpec((tb, out_size), lambda i: (i, 0)),
        compiler_params=pltpu.CompilerParams(
            dimension_semantics=("parallel",),   # megacore split on v7x
            vmem_limit_bytes=32 * 1024 * 1024,   # safe headroom on v5e/v6e/v7x
        ),
    )(x, w1, b1, w2, b2, w3, b3, w4, b4)
    return out


def dqn_reference(x, params):
    """Pure-JAX reference on the same parameters."""
    h = jnp.maximum(x @ params["w1"] + params["b1"], 0.0)
    h = jnp.maximum(h @ params["w2"] + params["b2"], 0.0)
    h = jnp.maximum(h @ params["w3"] + params["b3"], 0.0)
    return h @ params["w4"] + params["b4"]


if __name__ == "__main__":
    inp_size, out_size, batch = 32, 4, 2

    key = jax.random.PRNGKey(0)
    kx, kp = jax.random.split(key)
    x = jax.random.normal(kx, (batch, inp_size), dtype=jnp.float32)
    params = init_params(kp, inp_size, out_size)
    packed = pack_params(params)

    out = dqn_forward(x, packed)
    out = jax.block_until_ready(out)

    ref = dqn_reference(x, params)
    assert out.shape == (batch, out_size), out.shape
    assert jnp.allclose(out, ref, atol=1e-5, rtol=1e-5), \
        f"max abs diff {jnp.max(jnp.abs(out - ref))}"

    print("KERNEL_OK")
</pallas_src>

<mosaic_0001>
module attributes {stable_mosaic.version = 11 : i64} {
  func.func @dqn_kernel(%arg0: i32, %arg1: memref<8x32xf32, #tpu.memory_space<vmem>>, %arg2: memref<32x128xf32, #tpu.memory_space<vmem>>, %arg3: memref<1x128xf32, #tpu.memory_space<vmem>>, %arg4: memref<128x64xf32, #tpu.memory_space<vmem>>, %arg5: memref<1x64xf32, #tpu.memory_space<vmem>>, %arg6: memref<64x32xf32, #tpu.memory_space<vmem>>, %arg7: memref<1x32xf32, #tpu.memory_space<vmem>>, %arg8: memref<32x4xf32, #tpu.memory_space<vmem>>, %arg9: memref<1x4xf32, #tpu.memory_space<vmem>>, %arg10: memref<8x4xf32, #tpu.memory_space<vmem>>) attributes {dimension_semantics = [#tpu.dimension_semantics<parallel>], iteration_bounds = array<i64: 1>, scalar_prefetch = 0 : i64, scratch_operands = 0 : i64, tpu.core_type = #tpu.core_type<tc>, window_params = [{transform_indices = @transform_0, window_bounds = array<i64: 8, 32>}, {pipeline_mode = #tpu.pipeline_mode<synchronous>, transform_indices = @transform_1, window_bounds = array<i64: 32, 128>}, {pipeline_mode = #tpu.pipeline_mode<synchronous>, transform_indices = @transform_2, window_bounds = array<i64: 1, 128>}, {pipeline_mode = #tpu.pipeline_mode<synchronous>, transform_indices = @transform_3, window_bounds = array<i64: 128, 64>}, {pipeline_mode = #tpu.pipeline_mode<synchronous>, transform_indices = @transform_4, window_bounds = array<i64: 1, 64>}, {pipeline_mode = #tpu.pipeline_mode<synchronous>, transform_indices = @transform_5, window_bounds = array<i64: 64, 32>}, {pipeline_mode = #tpu.pipeline_mode<synchronous>, transform_indices = @transform_6, window_bounds = array<i64: 1, 32>}, {pipeline_mode = #tpu.pipeline_mode<synchronous>, transform_indices = @transform_7, window_bounds = array<i64: 32, 4>}, {pipeline_mode = #tpu.pipeline_mode<synchronous>, transform_indices = @transform_8, window_bounds = array<i64: 1, 4>}, {transform_indices = @transform_9, window_bounds = array<i64: 8, 4>}]} {
    %c0 = arith.constant 0 : index
    %c0_0 = arith.constant 0 : index
    %0 = vector.load %arg1[%c0, %c0_0] : memref<8x32xf32, #tpu.memory_space<vmem>>, vector<8x32xf32>
    %c0_1 = arith.constant 0 : index
    %c0_2 = arith.constant 0 : index
    %1 = vector.load %arg2[%c0_1, %c0_2] : memref<32x128xf32, #tpu.memory_space<vmem>>, vector<32x128xf32>
    %cst = arith.constant dense<0.000000e+00> : vector<8x128xf32>
    %2 = tpu.matmul %0, %1, %cst {dimension_numbers = #tpu.dot_dimension_numbers<[1], [0], [0], [1], [0, 0, 1, 1], [], []>} : vector<8x32xf32>, vector<32x128xf32>, vector<8x128xf32> -> vector<8x128xf32>
    %c0_3 = arith.constant 0 : index
    %c0_4 = arith.constant 0 : index
    %3 = vector.load %arg3[%c0_3, %c0_4] : memref<1x128xf32, #tpu.memory_space<vmem>>, vector<1x128xf32>
    %4 = vector.broadcast %3 : vector<1x128xf32> to vector<8x128xf32>
    %5 = arith.addf %2, %4 : vector<8x128xf32>
    %cst_5 = arith.constant 0.000000e+00 : f32
    %6 = vector.broadcast %cst_5 : f32 to vector<8x128xf32>
    %7 = arith.maximumf %5, %6 : vector<8x128xf32>
    %c0_6 = arith.constant 0 : index
    %c0_7 = arith.constant 0 : index
    %8 = vector.load %arg4[%c0_6, %c0_7] : memref<128x64xf32, #tpu.memory_space<vmem>>, vector<128x64xf32>
    %cst_8 = arith.constant dense<0.000000e+00> : vector<8x64xf32>
    %9 = tpu.matmul %7, %8, %cst_8 {dimension_numbers = #tpu.dot_dimension_numbers<[1], [0], [0], [1], [0, 0, 1, 1], [], []>} : vector<8x128xf32>, vector<128x64xf32>, vector<8x64xf32> -> vector<8x64xf32>
    %c0_9 = arith.constant 0 : index
    %c0_10 = arith.constant 0 : index
    %10 = vector.load %arg5[%c0_9, %c0_10] : memref<1x64xf32, #tpu.memory_space<vmem>>, vector<1x64xf32>
    %11 = vector.broadcast %10 : vector<1x64xf32> to vector<8x64xf32>
    %12 = arith.addf %9, %11 : vector<8x64xf32>
    %cst_11 = arith.constant 0.000000e+00 : f32
    %13 = vector.broadcast %cst_11 : f32 to vector<8x64xf32>
    %14 = arith.maximumf %12, %13 : vector<8x64xf32>
    %c0_12 = arith.constant 0 : index
    %c0_13 = arith.constant 0 : index
    %15 = vector.load %arg6[%c0_12, %c0_13] : memref<64x32xf32, #tpu.memory_space<vmem>>, vector<64x32xf32>
    %cst_14 = arith.constant dense<0.000000e+00> : vector<8x32xf32>
    %16 = tpu.matmul %14, %15, %cst_14 {dimension_numbers = #tpu.dot_dimension_numbers<[1], [0], [0], [1], [0, 0, 1, 1], [], []>} : vector<8x64xf32>, vector<64x32xf32>, vector<8x32xf32> -> vector<8x32xf32>
    %c0_15 = arith.constant 0 : index
    %c0_16 = arith.constant 0 : index
    %17 = vector.load %arg7[%c0_15, %c0_16] : memref<1x32xf32, #tpu.memory_space<vmem>>, vector<1x32xf32>
    %18 = vector.broadcast %17 : vector<1x32xf32> to vector<8x32xf32>
    %19 = arith.addf %16, %18 : vector<8x32xf32>
    %cst_17 = arith.constant 0.000000e+00 : f32
    %20 = vector.broadcast %cst_17 : f32 to vector<8x32xf32>
    %21 = arith.maximumf %19, %20 : vector<8x32xf32>
    %c0_18 = arith.constant 0 : index
    %c0_19 = arith.constant 0 : index
    %22 = vector.load %arg8[%c0_18, %c0_19] : memref<32x4xf32, #tpu.memory_space<vmem>>, vector<32x4xf32>
    %cst_20 = arith.constant dense<0.000000e+00> : vector<8x4xf32>
    %23 = tpu.matmul %21, %22, %cst_20 {dimension_numbers = #tpu.dot_dimension_numbers<[1], [0], [0], [1], [0, 0, 1, 1], [], []>} : vector<8x32xf32>, vector<32x4xf32>, vector<8x4xf32> -> vector<8x4xf32>
    %c0_21 = arith.constant 0 : index
    %c0_22 = arith.constant 0 : index
    %24 = vector.load %arg9[%c0_21, %c0_22] : memref<1x4xf32, #tpu.memory_space<vmem>>, vector<1x4xf32>
    %25 = vector.broadcast %24 : vector<1x4xf32> to vector<8x4xf32>
    %26 = arith.addf %23, %25 : vector<8x4xf32>
    %c0_23 = arith.constant 0 : index
    %c0_24 = arith.constant 0 : index
    %27 = vector.load %arg10[%c0_23, %c0_24] : memref<8x4xf32, #tpu.memory_space<vmem>>, vector<8x4xf32>
    tpu.vector_store %arg10[%c0_23, %c0_24], %26 {strides = array<i32>} : memref<8x4xf32, #tpu.memory_space<vmem>>, vector<8x4xf32>,
    return
  }
  func.func @transform_0(%arg0: i32) -> (i32, i32) {
    %c0_i32 = arith.constant 0 : i32
    %c0_i32_0 = arith.constant 0 : i32
    return %arg0, %c0_i32 : i32, i32
  }
  func.func @transform_1(%arg0: i32) -> (i32, i32) {
    %c0_i32 = arith.constant 0 : i32
    %c0_i32_0 = arith.constant 0 : i32
    %c0_i32_1 = arith.constant 0 : i32
    return %c0_i32, %c0_i32_0 : i32, i32
  }
  func.func @transform_2(%arg0: i32) -> (i32, i32) {
    %c0_i32 = arith.constant 0 : i32
    %c0_i32_0 = arith.constant 0 : i32
    %c0_i32_1 = arith.constant 0 : i32
    return %c0_i32, %c0_i32_0 : i32, i32
  }
  func.func @transform_3(%arg0: i32) -> (i32, i32) {
    %c0_i32 = arith.constant 0 : i32
    %c0_i32_0 = arith.constant 0 : i32
    %c0_i32_1 = arith.constant 0 : i32
    return %c0_i32, %c0_i32_0 : i32, i32
  }
  func.func @transform_4(%arg0: i32) -> (i32, i32) {
    %c0_i32 = arith.constant 0 : i32
    %c0_i32_0 = arith.constant 0 : i32
    %c0_i32_1 = arith.constant 0 : i32
    return %c0_i32, %c0_i32_0 : i32, i32
  }
  func.func @transform_5(%arg0: i32) -> (i32, i32) {
    %c0_i32 = arith.constant 0 : i32
    %c0_i32_0 = arith.constant 0 : i32
    %c0_i32_1 = arith.constant 0 : i32
    return %c0_i32, %c0_i32_0 : i32, i32
  }
  func.func @transform_6(%arg0: i32) -> (i32, i32) {
    %c0_i32 = arith.constant 0 : i32
    %c0_i32_0 = arith.constant 0 : i32
    %c0_i32_1 = arith.constant 0 : i32
    return %c0_i32, %c0_i32_0 : i32, i32
  }
  func.func @transform_7(%arg0: i32) -> (i32, i32) {
    %c0_i32 = arith.constant 0 : i32
    %c0_i32_0 = arith.constant 0 : i32
    %c0_i32_1 = arith.constant 0 : i32
    return %c0_i32, %c0_i32_0 : i32, i32
  }
  func.func @transform_8(%arg0: i32) -> (i32, i32) {
    %c0_i32 = arith.constant 0 : i32
    %c0_i32_0 = arith.constant 0 : i32
    %c0_i32_1 = arith.constant 0 : i32
    return %c0_i32, %c0_i32_0 : i32, i32
  }
  func.func @transform_9(%arg0: i32) -> (i32, i32) {
    %c0_i32 = arith.constant 0 : i32
    %c0_i32_0 = arith.constant 0 : i32
    return %arg0, %c0_i32 : i32, i32
  }
}

</mosaic_0001>

<llo_original>
// kernel: tpu_custom_call.1
$region0: #{tpu_custom_call.1}
  #allocation0 [shape = 'u32[]', space=smem, size = 0x4, offset = 0x4, fixed_abs, tag = 'smem constant byte address 0x4 - core index']
  #allocation1 [shape = 'u32[144,128]{1,0:T(1,128)}', space=vmem, size = 0x12000, scoped, tag = 'internal scratch']
  %s0 = inlined_call_operand.vmem [shape: f32[2,32], index: 0, kind: input, shape index: {}]
  %s1 = inlined_call_operand.vmem [shape: f32[32,128], index: 1, kind: input, shape index: {}]
  %s2 = inlined_call_operand.vmem [shape: f32[1,128], index: 2, kind: input, shape index: {}]
  %s3 = inlined_call_operand.vmem [shape: f32[128,64], index: 3, kind: input, shape index: {}]
  %s4 = inlined_call_operand.vmem [shape: f32[1,64], index: 4, kind: input, shape index: {}]
  %s5 = inlined_call_operand.vmem [shape: f32[64,32], index: 5, kind: input, shape index: {}]
  %s6 = inlined_call_operand.vmem [shape: f32[1,32], index: 6, kind: input, shape index: {}]
  %s7 = inlined_call_operand.vmem [shape: f32[32,4], index: 7, kind: input, shape index: {}]
  %s8 = inlined_call_operand.vmem [shape: f32[1,4], index: 8, kind: input, shape index: {}]
  %s9 = inlined_call_operand.hbm [shape: f32[2,4], index: 9, kind: output, shape index: {}]
  %s10 = sld [smem:[#allocation0]]
  $region46: #{tpu_custom_call.1} parent=0
    _
  %s12 = ssub.s32 1, %s10
  %s13 = scalar_select 0, %s12, %s10
  $region1: #{tpu_custom_call.1} parent=0
    #allocation2 [shape = 'u8[4096]{0}', space=vmem, size = 0x1000, scoped, tag = 'output window, operand 0, single buffered']
    #allocation3 [shape = 's32[1]{0}', space=sflag, size = 0x4, scoped, tag = 'scoped memory for tpu_custom_call.1']
    %14 = vsyncpa [#allocation3], 0
    // Predicated region
    $region2: #{tpu_custom_call.1} parent=1 // pred_check
      _
    $region3: #{tpu_custom_call.1} parent=1 // pred_check_branch
      %16 = sbr.rel (0) target = $region5
    $region4: #{tpu_custom_call.1} parent=1 // pred_region
      _
    $region5: #{tpu_custom_call.1} parent=1 // pred_fallthru
      _
    // Predicated region
    $region6: #{tpu_custom_call.1} parent=1 // pred_check
      _
    $region7: #{tpu_custom_call.1} parent=1 // pred_check_branch
      %18 = sbr.rel (0) target = $region9
    $region8: #{tpu_custom_call.1} parent=1 // pred_region
      _
    $region9: #{tpu_custom_call.1} parent=1 // pred_fallthru
      _
    // Predicated region
    $region10: #{tpu_custom_call.1} parent=1 // pred_check
      _
    $region11: #{tpu_custom_call.1} parent=1 // pred_check_branch
      %20 = sbr.rel (0) target = $region13
    $region12: #{tpu_custom_call.1} parent=1 // pred_region
      _
    $region13: #{tpu_custom_call.1} parent=1 // pred_fallthru
      _
    // Predicated region
    $region14: #{tpu_custom_call.1} parent=1 // pred_check
      _
    $region15: #{tpu_custom_call.1} parent=1 // pred_check_branch
      %22 = sbr.rel (0) target = $region17
    $region16: #{tpu_custom_call.1} parent=1 // pred_region
      _
    $region17: #{tpu_custom_call.1} parent=1 // pred_fallthru
      _
    // Predicated region
    $region18: #{tpu_custom_call.1} parent=1 // pred_check
      _
    $region19: #{tpu_custom_call.1} parent=1 // pred_check_branch
      %24 = sbr.rel (0) target = $region21
    $region20: #{tpu_custom_call.1} parent=1 // pred_region
      _
    $region21: #{tpu_custom_call.1} parent=1 // pred_fallthru
      _
    // Predicated region
    $region22: #{tpu_custom_call.1} parent=1 // pred_check
      _
    $region23: #{tpu_custom_call.1} parent=1 // pred_check_branch
      %26 = sbr.rel (0) target = $region25
    $region24: #{tpu_custom_call.1} parent=1 // pred_region
      _
    $region25: #{tpu_custom_call.1} parent=1 // pred_fallthru
      _
    // Predicated region
    $region26: #{tpu_custom_call.1} parent=1 // pred_check
      _
    $region27: #{tpu_custom_call.1} parent=1 // pred_check_branch
      %28 = sbr.rel (0) target = $region29
    $region28: #{tpu_custom_call.1} parent=1 // pred_region
      _
    $region29: #{tpu_custom_call.1} parent=1 // pred_fallthru
      _
    // Predicated region
    $region30: #{tpu_custom_call.1} parent=1 // pred_check
      _
    $region31: #{tpu_custom_call.1} parent=1 // pred_check_branch
      %30 = sbr.rel (0) target = $region33
    $region32: #{tpu_custom_call.1} parent=1 // pred_region
      _
    $region33: #{tpu_custom_call.1} parent=1 // pred_fallthru
      _
    // Predicated region
    $region34: #{tpu_custom_call.1} parent=1 // pred_check
      _
    $region35: #{tpu_custom_call.1} parent=1 // pred_check_branch
      %32 = sbr.rel (0) target = $region37
    $region36: #{tpu_custom_call.1} parent=1 // pred_region
      _
    $region37: #{tpu_custom_call.1} parent=1 // pred_fallthru
      _
    %v33 = vld [vmem:[%s0] sm:$0xff]
    %v34 = vld [vmem:[%s1] sm:$0xff]
    %v35 = vld [vmem:[%s1 + $0x8] sm:$0xff]
    %v36 = vld [vmem:[%s1 + $0x10] sm:$0xff]
    %v37 = vld [vmem:[%s1 + $0x18] sm:$0xff]
    %v38 = vld [vmem:[%s2] sm:$0x1]
    %v40 = vlaneseq
    %v41 = vshrl.u32 %v40, 7
    %v42 = vsub.s32 0, %v41
    %v43 = vrot.slane %v38, %v42
    %vm45 = vcmask 261120
    %v47 = vsel %vm45, %v33, 0
    %49 = vmatprep.subr.mxu0 0.0
    %50 = vmatpush1.msra.mxu0 0.0
    %51 = vmatprep.subr.mxu0 0.0
    %52 = vmatpush1.msra.mxu0 0.0
    %53 = vmatprep.subr.mxu0 0.0
    %54 = vmatpush1.msra.mxu0 0.0
    %55 = vmatprep.subr.mxu0 0.0
    %56 = vmatpush1.msra.mxu0 0.0
    %57 = vmatprep.subr.mxu0 0.0
    %58 = vmatpush1.msra.mxu0 0.0
    %59 = vmatprep.subr.mxu0 0.0
    %60 = vmatpush1.msra.mxu0 0.0
    %61 = vmatprep.subr.mxu0 0.0
    %62 = vmatpush1.msra.mxu0 0.0
    %63 = vmatprep.subr.mxu0 0.0
    %64 = vmatpush1.msra.mxu0 0.0
    %65 = vmatprep.subr.mxu0 0.0
    %66 = vmatpush1.msra.mxu0 0.0
    %67 = vmatprep.subr.mxu0 0.0
    %68 = vmatpush1.msra.mxu0 0.0
    %69 = vmatprep.subr.mxu0 0.0
    %70 = vmatpush1.msra.mxu0 0.0
    %71 = vmatprep.subr.mxu0 0.0
    %72 = vmatpush1.msra.mxu0 0.0
    %73 = vmatprep.subr.mxu0 0.0
    %74 = vmatpush1.msra.mxu0 %v37
    %75 = vmatprep.subr.mxu0 0.0
    %76 = vmatpush1.msra.mxu0 %v36
    %77 = vmatprep.subr.mxu0 0.0
    %78 = vmatpush1.msra.mxu0 %v35
    %79 = vmatprep.subr.mxu0 0.0
    %80 = vmatpush1.msra.mxu0 %v34
    %81 = vmatprep.subr.mxu0 0.0
    %82 = vmatpush2.msra.mxu0 0.0
    %83 = vmatprep.subr.mxu0 0.0
    %84 = vmatpush2.msra.mxu0 0.0
    %85 = vmatprep.subr.mxu0 0.0
    %86 = vmatpush2.msra.mxu0 0.0
    %87 = vmatprep.subr.mxu0 0.0
    %88 = vmatpush2.msra.mxu0 0.0
    %89 = vmatprep.subr.mxu0 0.0
    %90 = vmatpush2.msra.mxu0 0.0
    %91 = vmatprep.subr.mxu0 0.0
    %92 = vmatpush2.msra.mxu0 0.0
    %93 = vmatprep.subr.mxu0 0.0
    %94 = vmatpush2.msra.mxu0 0.0
    %95 = vmatprep.subr.mxu0 0.0
    %96 = vmatpush2.msra.mxu0 0.0
    %97 = vmatprep.subr.mxu0 0.0
    %98 = vmatpush2.msra.mxu0 0.0
    %99 = vmatprep.subr.mxu0 0.0
    %100 = vmatpush2.msra.mxu0 0.0
    %101 = vmatprep.subr.mxu0 0.0
    %102 = vmatpush2.msra.mxu0 0.0
    %103 = vmatprep.subr.mxu0 0.0
    %104 = vmatpush2.msra.mxu0 0.0
    %105 = vmatprep.subr.mxu0 0.0
    %106 = vmatpush2.msra.mxu0 0.0
    %107 = vmatprep.subr.mxu0 0.0
    %108 = vmatpush2.msra.mxu0 0.0
    %109 = vmatprep.subr.mxu0 0.0
    %110 = vmatpush2.msra.mxu0 0.0
    %111 = vmatprep.subr.mxu0 0.0
    %112 = vmatpush2.msra.mxu0 0.0
    %113 = vmatprep.mubr.f32.mxu0 0.0
    %114 = vmatmul.mubr.f32.gmra.mxu0 %v47
    %v115 = vpop.f32.mrf.mxu0
    %v116 = vadd.f32 %v43, %v115
    %v117 = vpop.f32.mrf.mxu0
    %118 = vdwg.mxu0
    %v119 = vmax.f32 %v116, 0.0
    %v120 = vld [vmem:[%s3] sm:$0xff]
    %v121 = vld [vmem:[%s3 + $0x8] sm:$0xff]
    %v122 = vld [vmem:[%s3 + $0x10] sm:$0xff]
    %v123 = vld [vmem:[%s3 + $0x18] sm:$0xff]
    %v124 = vld [vmem:[%s3 + $0x20] sm:$0xff]
    %v125 = vld [vmem:[%s3 + $0x28] sm:$0xff]
    %v126 = vld [vmem:[%s3 + $0x30] sm:$0xff]
    %v127 = vld [vmem:[%s3 + $0x38] sm:$0xff]
    %v128 = vld [vmem:[%s3 + $0x40] sm:$0xff]
    %v129 = vld [vmem:[%s3 + $0x48] sm:$0xff]
    %v130 = vld [vmem:[%s3 + $0x50] sm:$0xff]
    %v131 = vld [vmem:[%s3 + $0x58] sm:$0xff]
    %v132 = vld [vmem:[%s3 + $0x60] sm:$0xff]
    %v133 = vld [vmem:[%s3 + $0x68] sm:$0xff]
    %v134 = vld [vmem:[%s3 + $0x70] sm:$0xff]
    %v135 = vld [vmem:[%s3 + $0x78] sm:$0xff]
    %v136 = vld [vmem:[%s4] sm:$0x1]
    %v138 = vlaneseq
    %v139 = vshrl.u32 %v138, 7
    %v140 = vsub.s32 0, %v139
    %v141 = vrot.slane %v136, %v140
    %143 = vmatprep.subr.mxu0 0.0
    %144 = vmatpush1.msra.mxu0 %v135
    %145 = vmatprep.subr.mxu0 0.0
    %146 = vmatpush1.msra.mxu0 %v134
    %147 = vmatprep.subr.mxu0 0.0
    %148 = vmatpush1.msra.mxu0 %v133
    %149 = vmatprep.subr.mxu0 0.0
    %150 = vmatpush1.msra.mxu0 %v132
    %151 = vmatprep.subr.mxu0 0.0
    %152 = vmatpush1.msra.mxu0 %v131
    %153 = vmatprep.subr.mxu0 0.0
    %154 = vmatpush1.msra.mxu0 %v130
    %155 = vmatprep.subr.mxu0 0.0
    %156 = vmatpush1.msra.mxu0 %v129
    %157 = vmatprep.subr.mxu0 0.0
    %158 = vmatpush1.msra.mxu0 %v128
    %159 = vmatprep.subr.mxu0 0.0
    %160 = vmatpush1.msra.mxu0 %v127
    %161 = vmatprep.subr.mxu0 0.0
    %162 = vmatpush1.msra.mxu0 %v126
    %163 = vmatprep.subr.mxu0 0.0
    %164 = vmatpush1.msra.mxu0 %v125
    %165 = vmatprep.subr.mxu0 0.0
    %166 = vmatpush1.msra.mxu0 %v124
    %167 = vmatprep.subr.mxu0 0.0
    %168 = vmatpush1.msra.mxu0 %v123
    %169 = vmatprep.subr.mxu0 0.0
    %170 = vmatpush1.msra.mxu0 %v122
    %171 = vmatprep.subr.mxu0 0.0
    %172 = vmatpush1.msra.mxu0 %v121
    %173 = vmatprep.subr.mxu0 0.0
    %174 = vmatpush1.msra.mxu0 %v120
    %175 = vmatprep.subr.mxu0 0.0
    %176 = vmatpush2.msra.mxu0 0.0
    %177 = vmatprep.subr.mxu0 0.0
    %178 = vmatpush2.msra.mxu0 0.0
    %179 = vmatprep.subr.mxu0 0.0
    %180 = vmatpush2.msra.mxu0 0.0
    %181 = vmatprep.subr.mxu0 0.0
    %182 = vmatpush2.msra.mxu0 0.0
    %183 = vmatprep.subr.mxu0 0.0
    %184 = vmatpush2.msra.mxu0 0.0
    %185 = vmatprep.subr.mxu0 0.0
    %186 = vmatpush2.msra.mxu0 0.0
    %187 = vmatprep.subr.mxu0 0.0
    %188 = vmatpush2.msra.mxu0 0.0
    %189 = vmatprep.subr.mxu0 0.0
    %190 = vmatpush2.msra.mxu0 0.0
    %191 = vmatprep.subr.mxu0 0.0
    %192 = vmatpush2.msra.mxu0 0.0
    %193 = vmatprep.subr.mxu0 0.0
    %194 = vmatpush2.msra.mxu0 0.0
    %195 = vmatprep.subr.mxu0 0.0
    %196 = vmatpush2.msra.mxu0 0.0
    %197 = vmatprep.subr.mxu0 0.0
    %198 = vmatpush2.msra.mxu0 0.0
    %199 = vmatprep.subr.mxu0 0.0
    %200 = vmatpush2.msra.mxu0 0.0
    %201 = vmatprep.subr.mxu0 0.0
    %202 = vmatpush2.msra.mxu0 0.0
    %203 = vmatprep.subr.mxu0 0.0
    %204 = vmatpush2.msra.mxu0 0.0
    %205 = vmatprep.subr.mxu0 0.0
    %206 = vmatpush2.msra.mxu0 0.0
    %207 = vmatprep.mubr.f32.mxu0 0.0
    %208 = vmatmul.mubr.f32.gmra.mxu0 %v119
    %v209 = vpop.f32.mrf.mxu0
    %v210 = vadd.f32 %v141, %v209
    %v211 = vpop.f32.mrf.mxu0
    %212 = vdwg.mxu0
    %v213 = vmax.f32 %v210, 0.0
    %v214 = vld [vmem:[%s5] sm:$0xff]
    %v215 = vld [vmem:[%s5 + $0x8] sm:$0xff]
    %v216 = vld [vmem:[%s5 + $0x10] sm:$0xff]
    %v217 = vld [vmem:[%s5 + $0x18] sm:$0xff]
    %v218 = vld [vmem:[%s5 + $0x20] sm:$0xff]
    %v219 = vld [vmem:[%s5 + $0x28] sm:$0xff]
    %v220 = vld [vmem:[%s5 + $0x30] sm:$0xff]
    %v221 = vld [vmem:[%s5 + $0x38] sm:$0xff]
    %v222 = vld [vmem:[%s6] sm:$0x1]
    %v224 = vlaneseq
    %v225 = vshrl.u32 %v224, 7
    %v226 = vsub.s32 0, %v225
    %v227 = vrot.slane %v222, %v226
    %vm229 = vcmask 523264
    %v231 = vsel %vm229, %v213, 0
    %233 = vmatprep.subr.mxu0 0.0
    %234 = vmatpush1.msra.mxu0 0.0
    %235 = vmatprep.subr.mxu0 0.0
    %236 = vmatpush1.msra.mxu0 0.0
    %237 = vmatprep.subr.mxu0 0.0
    %238 = vmatpush1.msra.mxu0 0.0
    %239 = vmatprep.subr.mxu0 0.0
    %240 = vmatpush1.msra.mxu0 0.0
    %241 = vmatprep.subr.mxu0 0.0
    %242 = vmatpush1.msra.mxu0 0.0
    %243 = vmatprep.subr.mxu0 0.0
    %244 = vmatpush1.msra.mxu0 0.0
    %245 = vmatprep.subr.mxu0 0.0
    %246 = vmatpush1.msra.mxu0 0.0
    %247 = vmatprep.subr.mxu0 0.0
    %248 = vmatpush1.msra.mxu0 0.0
    %249 = vmatprep.subr.mxu0 0.0
    %250 = vmatpush1.msra.mxu0 %v221
    %251 = vmatprep.subr.mxu0 0.0
    %252 = vmatpush1.msra.mxu0 %v220
    %253 = vmatprep.subr.mxu0 0.0
    %254 = vmatpush1.msra.mxu0 %v219
    %255 = vmatprep.subr.mxu0 0.0
    %256 = vmatpush1.msra.mxu0 %v218
    %257 = vmatprep.subr.mxu0 0.0
    %258 = vmatpush1.msra.mxu0 %v217
    %259 = vmatprep.subr.mxu0 0.0
    %260 = vmatpush1.msra.mxu0 %v216
    %261 = vmatprep.subr.mxu0 0.0
    %262 = vmatpush1.msra.mxu0 %v215
    %263 = vmatprep.subr.mxu0 0.0
    %264 = vmatpush1.msra.mxu0 %v214
    %265 = vmatprep.subr.mxu0 0.0
    %266 = vmatpush2.msra.mxu0 0.0
    %267 = vmatprep.subr.mxu0 0.0
    %268 = vmatpush2.msra.mxu0 0.0
    %269 = vmatprep.subr.mxu0 0.0
    %270 = vmatpush2.msra.mxu0 0.0
    %271 = vmatprep.subr.mxu0 0.0
    %272 = vmatpush2.msra.mxu0 0.0
    %273 = vmatprep.subr.mxu0 0.0
    %274 = vmatpush2.msra.mxu0 0.0
    %275 = vmatprep.subr.mxu0 0.0
    %276 = vmatpush2.msra.mxu0 0.0
    %277 = vmatprep.subr.mxu0 0.0
    %278 = vmatpush2.msra.mxu0 0.0
    %279 = vmatprep.subr.mxu0 0.0
    %280 = vmatpush2.msra.mxu0 0.0
    %281 = vmatprep.subr.mxu0 0.0
    %282 = vmatpush2.msra.mxu0 0.0
    %283 = vmatprep.subr.mxu0 0.0
    %284 = vmatpush2.msra.mxu0 0.0
    %285 = vmatprep.subr.mxu0 0.0
    %286 = vmatpush2.msra.mxu0 0.0
    %287 = vmatprep.subr.mxu0 0.0
    %288 = vmatpush2.msra.mxu0 0.0
    %289 = vmatprep.subr.mxu0 0.0
    %290 = vmatpush2.msra.mxu0 0.0
    %291 = vmatprep.subr.mxu0 0.0
    %292 = vmatpush2.msra.mxu0 0.0
    %293 = vmatprep.subr.mxu0 0.0
    %294 = vmatpush2.msra.mxu0 0.0
    %295 = vmatprep.subr.mxu0 0.0
    %296 = vmatpush2.msra.mxu0 0.0
    %297 = vmatprep.mubr.f32.mxu0 0.0
    %298 = vmatmul.mubr.f32.gmra.mxu0 %v231
    %v299 = vpop.f32.mrf.mxu0
    %v300 = vadd.f32 %v227, %v299
    %v301 = vpop.f32.mrf.mxu0
    %302 = vdwg.mxu0
    %v303 = vmax.f32 %v300, 0.0
    %v304 = vld [vmem:[%s7] sm:$0xff]
    %v305 = vld [vmem:[%s7 + $0x8] sm:$0xff]
    %v306 = vld [vmem:[%s7 + $0x10] sm:$0xff]
    %v307 = vld [vmem:[%s7 + $0x18] sm:$0xff]
    %v308 = vld [vmem:[%s8] sm:$0x1]
    %v310 = vlaneseq
    %v311 = vshrl.u32 %v310, 7
    %v312 = vsub.s32 0, %v311
    %v313 = vrot.slane %v308, %v312
    %v316 = vsel %vm45, %v303, 0
    %318 = vmatprep.subr.mxu0 0.0
    %319 = vmatpush1.msra.mxu0 0.0
    %320 = vmatprep.subr.mxu0 0.0
    %321 = vmatpush1.msra.mxu0 0.0
    %322 = vmatprep.subr.mxu0 0.0
    %323 = vmatpush1.msra.mxu0 0.0
    %324 = vmatprep.subr.mxu0 0.0
    %325 = vmatpush1.msra.mxu0 0.0
    %326 = vmatprep.subr.mxu0 0.0
    %327 = vmatpush1.msra.mxu0 0.0
    %328 = vmatprep.subr.mxu0 0.0
    %329 = vmatpush1.msra.mxu0 0.0
    %330 = vmatprep.subr.mxu0 0.0
    %331 = vmatpush1.msra.mxu0 0.0
    %332 = vmatprep.subr.mxu0 0.0
    %333 = vmatpush1.msra.mxu0 0.0
    %334 = vmatprep.subr.mxu0 0.0
    %335 = vmatpush1.msra.mxu0 0.0
    %336 = vmatprep.subr.mxu0 0.0
    %337 = vmatpush1.msra.mxu0 0.0
    %338 = vmatprep.subr.mxu0 0.0
    %339 = vmatpush1.msra.mxu0 0.0
    %340 = vmatprep.subr.mxu0 0.0
    %341 = vmatpush1.msra.mxu0 0.0
    %342 = vmatprep.subr.mxu0 0.0
    %343 = vmatpush1.msra.mxu0 %v307
    %344 = vmatprep.subr.mxu0 0.0
    %345 = vmatpush1.msra.mxu0 %v306
    %346 = vmatprep.subr.mxu0 0.0
    %347 = vmatpush1.msra.mxu0 %v305
    %348 = vmatprep.subr.mxu0 0.0
    %349 = vmatpush1.msra.mxu0 %v304
    %350 = vmatprep.subr.mxu0 0.0
    %351 = vmatpush2.msra.mxu0 0.0
    %352 = vmatprep.subr.mxu0 0.0
    %353 = vmatpush2.msra.mxu0 0.0
    %354 = vmatprep.subr.mxu0 0.0
    %355 = vmatpush2.msra.mxu0 0.0
    %356 = vmatprep.subr.mxu0 0.0
    %357 = vmatpush2.msra.mxu0 0.0
    %358 = vmatprep.subr.mxu0 0.0
    %359 = vmatpush2.msra.mxu0 0.0
    %360 = vmatprep.subr.mxu0 0.0
    %361 = vmatpush2.msra.mxu0 0.0
    %362 = vmatprep.subr.mxu0 0.0
    %363 = vmatpush2.msra.mxu0 0.0
    %364 = vmatprep.subr.mxu0 0.0
    %365 = vmatpush2.msra.mxu0 0.0
    %366 = vmatprep.subr.mxu0 0.0
    %367 = vmatpush2.msra.mxu0 0.0
    %368 = vmatprep.subr.mxu0 0.0
    %369 = vmatpush2.msra.mxu0 0.0
    %370 = vmatprep.subr.mxu0 0.0
    %371 = vmatpush2.msra.mxu0 0.0
    %372 = vmatprep.subr.mxu0 0.0
    %373 = vmatpush2.msra.mxu0 0.0
    %374 = vmatprep.subr.mxu0 0.0
    %375 = vmatpush2.msra.mxu0 0.0
    %376 = vmatprep.subr.mxu0 0.0
    %377 = vmatpush2.msra.mxu0 0.0
    %378 = vmatprep.subr.mxu0 0.0
    %379 = vmatpush2.msra.mxu0 0.0
    %380 = vmatprep.subr.mxu0 0.0
    %381 = vmatpush2.msra.mxu0 0.0
    %382 = vmatprep.mubr.f32.mxu0 0.0
    %383 = vmatmul.mubr.f32.gmra.mxu0 %v316
    %v384 = vpop.f32.mrf.mxu0
    %v385 = vadd.f32 %v313, %v384
    %v386 = vpop.f32.mrf.mxu0
    %387 = vdwg.mxu0
    %vm388 = vcmask 31744
    %389 = vst.msk [vmem:[#allocation2] sm:$0xff] %vm388, %v385
    // Predicated region
    $region38: #{tpu_custom_call.1} parent=1 // pred_check
      _
    $region39: #{tpu_custom_call.1} parent=1 // pred_check_branch
      %391 = sbr.rel (0) target = $region41
    $region40: #{tpu_custom_call.1} parent=1 // pred_region
      %s393 = ssub.s32 128, 32
      %394 = vsyncadd [#allocation3], %s393
      %s395 = sshll.u32 [#allocation2], 4
      %s396 = int_to_ptr.vmem [resolvable:$true] %s395
      %401 = dma.vmem_to_hbm [thread:$0]  %s396, 32, %s9, [#allocation3], 32, 32, 2
    $region41: #{tpu_custom_call.1} parent=1 // pred_fallthru
      _
    // Predicated region
    $region42: #{tpu_custom_call.1} parent=1 // pred_check
      _
    $region43: #{tpu_custom_call.1} parent=1 // pred_check_branch
      %403 = sbr.rel (0) target = $region45
    $region44: #{tpu_custom_call.1} parent=1 // pred_region
      %404 = dma.done [#allocation3], 128
    $region45: #{tpu_custom_call.1} parent=1 // pred_fallthru
      _
    %405 = vsyncpa [#allocation3], 1

</llo_original>
